<compile_context>
chip_gen: v6e
topology: v6e:2x2x1
jax: 0.10.0
libtpu: 0.0.40
codegen_flags: <defaults>
</compile_context>

<pallas_src>
import functools
import math

import jax
import jax.numpy as jnp
from jax import lax
from jax.experimental import pallas as pl
from jax.experimental.pallas import tpu as pltpu

_LANE = 128      # lane width (last dim tiling)
_SUBLANE = 8     # sublane width (second-to-last dim tiling)


def _round_up(x, m):
    return (x + m - 1) // m * m


def _pad2d(a, rows, cols):
    r, c = a.shape
    if r == rows and c == cols:
        return a
    return jnp.pad(a, ((0, rows - r), (0, cols - c)))


def _vmem_capacity_bytes():
    """Physical VMEM of the attached chip; conservative 64 MiB fallback (v7x)."""
    try:
        info = pltpu.get_tpu_info()
        cap = getattr(info, "vmem_capacity_bytes", None)
        if cap:
            return int(cap)
    except Exception:
        pass
    return 64 * 1024 * 1024


def _mlp_kernel(x_ref, w1_ref, b1_ref, w23_ref, b23_ref, out_ref, *, approx_gelu):
    """One batch tile: two MXU matmuls + GELU; all dims lane/sublane padded."""
    mm_dtype = w1_ref.dtype            # f32 by default, bf16 if requested
    x = x_ref[...]                     # (TM, K1p), already mm_dtype

    # hidden_layers[0]: Linear(in_features -> inner_dim), f32 accumulation.
    h = jnp.dot(x.astype(mm_dtype), w1_ref[...],
                preferred_element_type=jnp.float32) + b1_ref[...]

    # hidden_layers[1]: GELU.  Exact erf matches nn.GELU's default; the tanh
    # approximation runs on the EUP slot (nearly free) but deviates slightly.
    if approx_gelu:
        h = jax.nn.gelu(h, approximate=True)
    else:
        h = 0.5 * h * (1.0 + lax.erf(h * (1.0 / math.sqrt(2.0))))

    # hidden_layers[3] + classifier fused:  (h @ W2 + b2) @ W3 + b3
    #   == h @ (W2 @ W3) + (b2 @ W3 + b3)   (Dropout(0.0) layers are identity)
    logits = jnp.dot(h.astype(mm_dtype), w23_ref[...],
                     preferred_element_type=jnp.float32) + b23_ref[...]

    out_ref[...] = logits.astype(out_ref.dtype)


def net_forward(pixel_values, params, *, block_m=512, mxu_dtype=jnp.float32,
                approx_gelu=False):
    """Forward pass of `Net`. pixel_values: (B, C, H, W).

    Returns logits of shape (B, num_labels)  (== Net.forward(...)[0], labels=None).
    `mxu_dtype=jnp.bfloat16` streams x and the weights in bf16 (higher MXU
    throughput + half the x HBM traffic on v6e/v7x); accumulation, GELU and
    bias adds stay f32.  Default f32 matches the PyTorch reference exactly.
    """
    b, c, h, w = pixel_values.shape
    in_features = c * h * w
    # torch .view(B, -1); reshape is metadata-only, astype is a no-op for f32.
    x = pixel_values.reshape(b, in_features).astype(mxu_dtype)

    w1, b1 = params["w1"], params["b1"]
    w2, b2 = params["w2"], params["b2"]
    w3, b3 = params["w3"], params["b3"]
    inner_dim = w1.shape[1]
    num_labels = w3.shape[1]

    # ---- fuse the last two Linear layers in the wrapper (tiny, f32, exact) ----
    w23 = jnp.dot(w2, w3, preferred_element_type=jnp.float32)
    b23 = (jnp.dot(b2.reshape(1, -1), w3, preferred_element_type=jnp.float32)
           + b3.reshape(1, -1))

    # ---- pad feature dims to multiples of 128 (zero padding is exact) ----
    k1p = _round_up(in_features, _LANE)
    n1p = _round_up(inner_dim, _LANE)
    n3p = _round_up(num_labels, _LANE)     # lane-dense output

    # ---- batch tile: multiple of 8 sublanes, >=2 grid steps when possible,
    #      capped at block_m.  No batch padding; grid uses cdiv. ----
    tm = max(_SUBLANE, min(block_m, _round_up(pl.cdiv(b, 2), _SUBLANE)))
    grid = (pl.cdiv(b, tm),)

    x_p = _pad2d(x, b, k1p)                          # no-op when k1p == in_features
    w1_p = _pad2d(w1, k1p, n1p).astype(mxu_dtype)
    w23_p = _pad2d(w23, n1p, n3p).astype(mxu_dtype)
    b1_p = _pad2d(b1.reshape(1, -1), 1, n1p).astype(jnp.float32)
    b23_p = _pad2d(b23, 1, n3p).astype(jnp.float32)

    # ---- VMEM budget: (possibly double-buffered) resident weights +
    #      double-buffered x/out tiles + intermediate slack, capped at 85% of
    #      the chip's physical VMEM ----
    x_itemsize = jnp.dtype(x_p.dtype).itemsize
    w_itemsize = jnp.dtype(mxu_dtype).itemsize
    resident = 2 * ((k1p * n1p + n1p * n3p) * w_itemsize + (n1p + n3p) * 4)
    per_step = 2 * tm * k1p * x_itemsize + 2 * tm * n3p * 4
    compute_scratch = 2 * tm * n1p * 4
    needed = resident + per_step + compute_scratch

    vmem_cap = _vmem_capacity_bytes()
    vmem_budget = int(min(int(0.85 * vmem_cap),
                          max(needed + (4 << 20), 16 << 20)))
    if needed > vmem_budget:
        # TODO(synk): K-tiled fallback (reduction grid axis + f32 accumulator)
        # for W1 blocks that exceed the VMEM budget.
        raise NotImplementedError(
            f"resident weights need {needed / 2**20:.1f} MiB but only "
            f"{vmem_budget / 2**20:.1f} MiB VMEM is available; "
            "K-tiled fallback not implemented.")

    def _resident_spec(shape):
        return pl.BlockSpec(shape, lambda i: (0, 0))   # same block every step

    kernel = functools.partial(_mlp_kernel, approx_gelu=approx_gelu)

    out_p = pl.pallas_call(
        kernel,
        out_shape=jax.ShapeDtypeStruct((b, n3p), jnp.float32),
        grid=grid,
        in_specs=[
            pl.BlockSpec((tm, k1p), lambda i: (i, 0)),   # x: batch-tiled, pipelined
            _resident_spec((k1p, n1p)),                  # W1 (VMEM-resident)
            _resident_spec((1, n1p)),                    # b1
            _resident_spec((n1p, n3p)),                  # W23 = W2 @ W3
            _resident_spec((1, n3p)),                    # b23 = b2 @ W3 + b3
        ],
        out_specs=pl.BlockSpec((tm, n3p), lambda i: (i, 0)),
        compiler_params=pltpu.CompilerParams(
            dimension_semantics=("parallel",),
            vmem_limit_bytes=vmem_budget,
        ),
    )(x_p, w1_p, b1_p, w23_p, b23_p)

    # strip the lane padding of the logits (cheap wrapper glue)
    return out_p[:, :num_labels]


def init_params(key, image_size, channels, dim, num_labels, expansion_factor=4):
    """Deterministic init matching Net.__init__ shapes.

    Weights stored (in_features, out_features); biases (1, out_features).
    """
    in_features = image_size * image_size * channels
    inner_dim = int(dim * expansion_factor)
    k1, k2, k3, k4, k5, k6 = jax.random.split(key, 6)

    def lin(kw, kb, fan_in, fan_out):
        bound = 1.0 / math.sqrt(fan_in)
        wgt = jax.random.uniform(kw, (fan_in, fan_out), jnp.float32, -bound, bound)
        bias = jax.random.uniform(kb, (1, fan_out), jnp.float32, -bound, bound)
        return wgt, bias

    w1, b1 = lin(k1, k2, in_features, inner_dim)
    w2, b2 = lin(k3, k4, inner_dim, dim)
    w3, b3 = lin(k5, k6, dim, num_labels)
    return {"w1": w1, "b1": b1, "w2": w2, "b2": b2, "w3": w3, "b3": b3}


def _reference(pixel_values, params):
    """Pure-JAX reference of the unfused PyTorch forward pass (f32)."""
    x = pixel_values.reshape(pixel_values.shape[0], -1).astype(jnp.float32)
    h = x @ params["w1"] + params["b1"]
    h = 0.5 * h * (1.0 + lax.erf(h / math.sqrt(2.0)))
    h = h @ params["w2"] + params["b2"]
    return h @ params["w3"] + params["b3"]


if __name__ == "__main__":
    # Shapes consistent with Net(image_size=16, channels=4, dim=32, num_labels=10)
    channels = 4
    image_size = 16
    dim = 32
    num_labels = 10

    key = jax.random.PRNGKey(0)
    k_params, k_x1, k_x2 = jax.random.split(key, 3)
    params = init_params(k_params, image_size, channels, dim, num_labels)

    # --- small batch (single grid step, partial last block) ---
    pixel_values = jax.random.normal(
        k_x1, (2, channels, image_size, image_size), jnp.float32)
    logits = net_forward(pixel_values, params)
    jax.block_until_ready(logits)
    ref = _reference(pixel_values, params)
    assert logits.shape == (2, num_labels)
    assert jnp.allclose(logits, ref, atol=2e-4, rtol=2e-4), "mismatch vs reference (B=2)"

    # --- larger, non-multiple batch: 2 grid steps, no batch padding ---
    pixel_values2 = jax.random.normal(
        k_x2, (300, channels, image_size, image_size), jnp.float32)
    logits2 = net_forward(pixel_values2, params)
    jax.block_until_ready(logits2)
    ref2 = _reference(pixel_values2, params)
    assert logits2.shape == (300, num_labels)
    assert jnp.allclose(logits2, ref2, atol=2e-4, rtol=2e-4), "mismatch vs reference (B=300)"

    # --- bf16 MXU-operand path (f32 accumulation): looser tolerance ---
    logits_bf16 = net_forward(pixel_values2, params, mxu_dtype=jnp.bfloat16)
    jax.block_until_ready(logits_bf16)
    assert logits_bf16.shape == (300, num_labels)
    assert jnp.allclose(logits_bf16, ref2, atol=1e-1, rtol=1e-1), \
        "mismatch vs reference (bf16 operands)"

    print("KERNEL_OK")
</pallas_src>

<mosaic_0001>
module attributes {stable_mosaic.version = 11 : i64} {
  func.func @_mlp_kernel(%arg0: i32, %arg1: memref<8x1024xf32, #tpu.memory_space<vmem>>, %arg2: memref<1024x128xf32, #tpu.memory_space<vmem>>, %arg3: memref<1x128xf32, #tpu.memory_space<vmem>>, %arg4: memref<128x128xf32, #tpu.memory_space<vmem>>, %arg5: memref<1x128xf32, #tpu.memory_space<vmem>>, %arg6: memref<8x128xf32, #tpu.memory_space<vmem>>) attributes {dimension_semantics = [#tpu.dimension_semantics<parallel>], iteration_bounds = array<i64: 1>, scalar_prefetch = 0 : i64, scratch_operands = 0 : i64, tpu.core_type = #tpu.core_type<tc>, window_params = [{transform_indices = @transform_0, window_bounds = array<i64: 8, 1024>}, {pipeline_mode = #tpu.pipeline_mode<synchronous>, transform_indices = @transform_1, window_bounds = array<i64: 1024, 128>}, {pipeline_mode = #tpu.pipeline_mode<synchronous>, transform_indices = @transform_2, window_bounds = array<i64: 1, 128>}, {pipeline_mode = #tpu.pipeline_mode<synchronous>, transform_indices = @transform_3, window_bounds = array<i64: 128, 128>}, {pipeline_mode = #tpu.pipeline_mode<synchronous>, transform_indices = @transform_4, window_bounds = array<i64: 1, 128>}, {transform_indices = @transform_5, window_bounds = array<i64: 8, 128>}]} {
    %c0 = arith.constant 0 : index
    %c0_0 = arith.constant 0 : index
    %0 = vector.load %arg1[%c0, %c0_0] : memref<8x1024xf32, #tpu.memory_space<vmem>>, vector<8x1024xf32>
    %c0_1 = arith.constant 0 : index
    %c0_2 = arith.constant 0 : index
    %1 = vector.load %arg2[%c0_1, %c0_2] : memref<1024x128xf32, #tpu.memory_space<vmem>>, vector<1024x128xf32>
    %cst = arith.constant dense<0.000000e+00> : vector<8x128xf32>
    %2 = tpu.matmul %0, %1, %cst {dimension_numbers = #tpu.dot_dimension_numbers<[1], [0], [0], [1], [0, 0, 1, 1], [], []>} : vector<8x1024xf32>, vector<1024x128xf32>, vector<8x128xf32> -> vector<8x128xf32>
    %c0_3 = arith.constant 0 : index
    %c0_4 = arith.constant 0 : index
    %3 = vector.load %arg3[%c0_3, %c0_4] : memref<1x128xf32, #tpu.memory_space<vmem>>, vector<1x128xf32>
    %4 = vector.broadcast %3 : vector<1x128xf32> to vector<8x128xf32>
    %5 = arith.addf %2, %4 : vector<8x128xf32>
    %cst_5 = arith.constant 5.000000e-01 : f32
    %6 = vector.broadcast %cst_5 : f32 to vector<8x128xf32>
    %7 = arith.mulf %6, %5 : vector<8x128xf32>
    %cst_6 = arith.constant 0.707106769 : f32
    %8 = vector.broadcast %cst_6 : f32 to vector<8x128xf32>
    %9 = arith.mulf %5, %8 : vector<8x128xf32>
    %10 = math.erf %9 : vector<8x128xf32>
    %cst_7 = arith.constant 1.000000e+00 : f32
    %11 = vector.broadcast %cst_7 : f32 to vector<8x128xf32>
    %12 = arith.addf %11, %10 : vector<8x128xf32>
    %13 = arith.mulf %7, %12 : vector<8x128xf32>
    %c0_8 = arith.constant 0 : index
    %c0_9 = arith.constant 0 : index
    %14 = vector.load %arg4[%c0_8, %c0_9] : memref<128x128xf32, #tpu.memory_space<vmem>>, vector<128x128xf32>
    %cst_10 = arith.constant dense<0.000000e+00> : vector<8x128xf32>
    %15 = tpu.matmul %13, %14, %cst_10 {dimension_numbers = #tpu.dot_dimension_numbers<[1], [0], [0], [1], [0, 0, 1, 1], [], []>} : vector<8x128xf32>, vector<128x128xf32>, vector<8x128xf32> -> vector<8x128xf32>
    %c0_11 = arith.constant 0 : index
    %c0_12 = arith.constant 0 : index
    %16 = vector.load %arg5[%c0_11, %c0_12] : memref<1x128xf32, #tpu.memory_space<vmem>>, vector<1x128xf32>
    %17 = vector.broadcast %16 : vector<1x128xf32> to vector<8x128xf32>
    %18 = arith.addf %15, %17 : vector<8x128xf32>
    %c0_13 = arith.constant 0 : index
    %c0_14 = arith.constant 0 : index
    %19 = vector.load %arg6[%c0_13, %c0_14] : memref<8x128xf32, #tpu.memory_space<vmem>>, vector<8x128xf32>
    tpu.vector_store %arg6[%c0_13, %c0_14], %18 {strides = array<i32>} : memref<8x128xf32, #tpu.memory_space<vmem>>, vector<8x128xf32>,
    return
  }
  func.func @transform_0(%arg0: i32) -> (i32, i32) {
    %c0_i32 = arith.constant 0 : i32
    %c0_i32_0 = arith.constant 0 : i32
    return %arg0, %c0_i32 : i32, i32
  }
  func.func @transform_1(%arg0: i32) -> (i32, i32) {
    %c0_i32 = arith.constant 0 : i32
    %c0_i32_0 = arith.constant 0 : i32
    %c0_i32_1 = arith.constant 0 : i32
    return %c0_i32, %c0_i32_0 : i32, i32
  }
  func.func @transform_2(%arg0: i32) -> (i32, i32) {
    %c0_i32 = arith.constant 0 : i32
    %c0_i32_0 = arith.constant 0 : i32
    %c0_i32_1 = arith.constant 0 : i32
    return %c0_i32, %c0_i32_0 : i32, i32
  }
  func.func @transform_3(%arg0: i32) -> (i32, i32) {
    %c0_i32 = arith.constant 0 : i32
    %c0_i32_0 = arith.constant 0 : i32
    %c0_i32_1 = arith.constant 0 : i32
    return %c0_i32, %c0_i32_0 : i32, i32
  }
  func.func @transform_4(%arg0: i32) -> (i32, i32) {
    %c0_i32 = arith.constant 0 : i32
    %c0_i32_0 = arith.constant 0 : i32
    %c0_i32_1 = arith.constant 0 : i32
    return %c0_i32, %c0_i32_0 : i32, i32
  }
  func.func @transform_5(%arg0: i32) -> (i32, i32) {
    %c0_i32 = arith.constant 0 : i32
    %c0_i32_0 = arith.constant 0 : i32
    return %arg0, %c0_i32 : i32, i32
  }
}

</mosaic_0001>

<llo_original>
// kernel: tpu_custom_call.1
$region0: #{tpu_custom_call.1}
  #allocation0 [shape = 'u32[]', space=smem, size = 0x4, offset = 0x4, fixed_abs, tag = 'smem constant byte address 0x4 - core index']
  #allocation1 [shape = 'u32[144,128]{1,0:T(1,128)}', space=vmem, size = 0x12000, scoped, tag = 'internal scratch']
  %s0 = inlined_call_operand.hbm [shape: f32[2,1024], index: 0, kind: input, shape index: {}]
  %s1 = inlined_call_operand.hbm [shape: f32[1024,128], index: 1, kind: input, shape index: {}]
  %s2 = inlined_call_operand.vmem [shape: f32[1,128], index: 2, kind: input, shape index: {}]
  %s3 = inlined_call_operand.hbm [shape: f32[128,128], index: 3, kind: input, shape index: {}]
  %s4 = inlined_call_operand.vmem [shape: f32[1,128], index: 4, kind: input, shape index: {}]
  %s5 = inlined_call_operand.hbm [shape: f32[2,128], index: 5, kind: output, shape index: {}]
  %s6 = sld [smem:[#allocation0]]
  $region42: #{tpu_custom_call.1} parent=0
    _
  %s8 = ssub.s32 1, %s6
  %s9 = scalar_select 0, %s8, %s6
  $region1: #{tpu_custom_call.1} parent=0
    #allocation2 [shape = 'u8[32768]{0}', space=vmem, size = 0x8000, scoped, tag = 'input window, operand 0, single buffered']
    #allocation3 [shape = 's32[1]{0}', space=sflag, size = 0x4, scoped, tag = 'scoped memory for tpu_custom_call.1']
    #allocation4 [shape = 's32[1]{0}', space=sflag, size = 0x4, scoped, tag = 'scoped memory for tpu_custom_call.1']
    #allocation5 [shape = 'u8[524288]{0}', space=vmem, size = 0x80000, scoped, tag = 'input window, operand 1, single buffered']
    #allocation6 [shape = 's32[1]{0}', space=sflag, size = 0x4, scoped, tag = 'scoped memory for tpu_custom_call.1']
    #allocation7 [shape = 'u8[65536]{0}', space=vmem, size = 0x10000, scoped, tag = 'input window, operand 3, single buffered']
    #allocation8 [shape = 'u8[4096]{0}', space=vmem, size = 0x1000, scoped, tag = 'output window, operand 0, single buffered']
    %10 = vsyncpa [#allocation3], 0
    %11 = vsyncpa [#allocation6], 0
    %12 = vsyncpa [#allocation4], 0
    // Predicated region
    $region2: #{tpu_custom_call.1} parent=1 // pred_check
      _
    $region3: #{tpu_custom_call.1} parent=1 // pred_check_branch
      %14 = sbr.rel (0) target = $region5
    $region4: #{tpu_custom_call.1} parent=1 // pred_region
      %s16 = ssub.s32 1024, 256
      %17 = vsyncadd [#allocation3], %s16
      %s18 = sshll.u32 [#allocation2], 4
      %s19 = int_to_ptr.vmem [resolvable:$true] %s18
      %24 = dma.hbm_to_vmem [thread:$0]  %s0, 256, %s19, [#allocation3], 256, 256, 16
    $region5: #{tpu_custom_call.1} parent=1 // pred_fallthru
      _
    // Predicated region
    $region6: #{tpu_custom_call.1} parent=1 // pred_check
      _
    $region7: #{tpu_custom_call.1} parent=1 // pred_check_branch
      %26 = sbr.rel (0) target = $region9
    $region8: #{tpu_custom_call.1} parent=1 // pred_region
      %s28 = ssub.s32 16384, 16384
      %29 = vsyncadd [#allocation6], %s28
      %s30 = sshll.u32 [#allocation5], 4
      %s31 = int_to_ptr.vmem [resolvable:$true] %s30
      %36 = dma.hbm_to_vmem [thread:$0]  %s1, 16384, %s31, [#allocation6], 128, 128, 8
    $region9: #{tpu_custom_call.1} parent=1 // pred_fallthru
      _
    // Predicated region
    $region10: #{tpu_custom_call.1} parent=1 // pred_check
      _
    $region11: #{tpu_custom_call.1} parent=1 // pred_check_branch
      %38 = sbr.rel (0) target = $region13
    $region12: #{tpu_custom_call.1} parent=1 // pred_region
      _
    $region13: #{tpu_custom_call.1} parent=1 // pred_fallthru
      _
    // Predicated region
    $region14: #{tpu_custom_call.1} parent=1 // pred_check
      _
    $region15: #{tpu_custom_call.1} parent=1 // pred_check_branch
      %40 = sbr.rel (0) target = $region17
    $region16: #{tpu_custom_call.1} parent=1 // pred_region
      %s42 = ssub.s32 2048, 2048
      %43 = vsyncadd [#allocation6], %s42
      %s44 = sshll.u32 [#allocation7], 4
      %s45 = int_to_ptr.vmem [resolvable:$true] %s44
      %50 = dma.hbm_to_vmem [thread:$0]  %s3, 2048, %s45, [#allocation6], 128, 128, 8
    $region17: #{tpu_custom_call.1} parent=1 // pred_fallthru
      _
    // Predicated region
    $region18: #{tpu_custom_call.1} parent=1 // pred_check
      _
    $region19: #{tpu_custom_call.1} parent=1 // pred_check_branch
      %52 = sbr.rel (0) target = $region21
    $region20: #{tpu_custom_call.1} parent=1 // pred_region
      _
    $region21: #{tpu_custom_call.1} parent=1 // pred_fallthru
      _
    // Predicated region
    $region22: #{tpu_custom_call.1} parent=1 // pred_check
      _
    $region23: #{tpu_custom_call.1} parent=1 // pred_check_branch
      %54 = sbr.rel (0) target = $region25
    $region24: #{tpu_custom_call.1} parent=1 // pred_region
      %55 = dma.done [#allocation3], 1024
    $region25: #{tpu_custom_call.1} parent=1 // pred_fallthru
      _
    // Predicated region
    $region26: #{tpu_custom_call.1} parent=1 // pred_check
      _
    $region27: #{tpu_custom_call.1} parent=1 // pred_check_branch
      %57 = sbr.rel (0) target = $region29
    $region28: #{tpu_custom_call.1} parent=1 // pred_region
      %58 = dma.done [#allocation6], 16384
    $region29: #{tpu_custom_call.1} parent=1 // pred_fallthru
      _
    // Predicated region
    $region30: #{tpu_custom_call.1} parent=1 // pred_check
      _
    $region31: #{tpu_custom_call.1} parent=1 // pred_check_branch
      %60 = sbr.rel (0) target = $region33
    $region32: #{tpu_custom_call.1} parent=1 // pred_region
      %61 = dma.done [#allocation6], 2048
    $region33: #{tpu_custom_call.1} parent=1 // pred_fallthru
      _
    %v62 = vld [vmem:[#allocation2] sm:$0xff]
    %v63 = vld [vmem:[#allocation2 + $0x8] sm:$0xff]
    %v64 = vld [vmem:[#allocation2 + $0x10] sm:$0xff]
    %v65 = vld [vmem:[#allocation2 + $0x18] sm:$0xff]
    %v66 = vld [vmem:[#allocation2 + $0x20] sm:$0xff]
    %v67 = vld [vmem:[#allocation2 + $0x28] sm:$0xff]
    %v68 = vld [vmem:[#allocation2 + $0x30] sm:$0xff]
    %v69 = vld [vmem:[#allocation2 + $0x38] sm:$0xff]
    %v70 = vld [vmem:[#allocation5] sm:$0xff]
    %v71 = vld [vmem:[#allocation5 + $0x8] sm:$0xff]
    %v72 = vld [vmem:[#allocation5 + $0x10] sm:$0xff]
    %v73 = vld [vmem:[#allocation5 + $0x18] sm:$0xff]
    %v74 = vld [vmem:[#allocation5 + $0x20] sm:$0xff]
    %v75 = vld [vmem:[#allocation5 + $0x28] sm:$0xff]
    %v76 = vld [vmem:[#allocation5 + $0x30] sm:$0xff]
    %v77 = vld [vmem:[#allocation5 + $0x38] sm:$0xff]
    %v78 = vld [vmem:[#allocation5 + $0x40] sm:$0xff]
    %v79 = vld [vmem:[#allocation5 + $0x48] sm:$0xff]
    %v80 = vld [vmem:[#allocation5 + $0x50] sm:$0xff]
    %v81 = vld [vmem:[#allocation5 + $0x58] sm:$0xff]
    %v82 = vld [vmem:[#allocation5 + $0x60] sm:$0xff]
    %v83 = vld [vmem:[#allocation5 + $0x68] sm:$0xff]
    %v84 = vld [vmem:[#allocation5 + $0x70] sm:$0xff]
    %v85 = vld [vmem:[#allocation5 + $0x78] sm:$0xff]
    %v86 = vld [vmem:[#allocation5 + $0x80] sm:$0xff]
    %v87 = vld [vmem:[#allocation5 + $0x88] sm:$0xff]
    %v88 = vld [vmem:[#allocation5 + $0x90] sm:$0xff]
    %v89 = vld [vmem:[#allocation5 + $0x98] sm:$0xff]
    %v90 = vld [vmem:[#allocation5 + $0xa0] sm:$0xff]
    %v91 = vld [vmem:[#allocation5 + $0xa8] sm:$0xff]
    %v92 = vld [vmem:[#allocation5 + $0xb0] sm:$0xff]
    %v93 = vld [vmem:[#allocation5 + $0xb8] sm:$0xff]
    %v94 = vld [vmem:[#allocation5 + $0xc0] sm:$0xff]
    %v95 = vld [vmem:[#allocation5 + $0xc8] sm:$0xff]
    %v96 = vld [vmem:[#allocation5 + $0xd0] sm:$0xff]
    %v97 = vld [vmem:[#allocation5 + $0xd8] sm:$0xff]
    %v98 = vld [vmem:[#allocation5 + $0xe0] sm:$0xff]
    %v99 = vld [vmem:[#allocation5 + $0xe8] sm:$0xff]
    %v100 = vld [vmem:[#allocation5 + $0xf0] sm:$0xff]
    %v101 = vld [vmem:[#allocation5 + $0xf8] sm:$0xff]
    %v102 = vld [vmem:[#allocation5 + $0x100] sm:$0xff]
    %v103 = vld [vmem:[#allocation5 + $0x108] sm:$0xff]
    %v104 = vld [vmem:[#allocation5 + $0x110] sm:$0xff]
    %v105 = vld [vmem:[#allocation5 + $0x118] sm:$0xff]
    %v106 = vld [vmem:[#allocation5 + $0x120] sm:$0xff]
    %v107 = vld [vmem:[#allocation5 + $0x128] sm:$0xff]
    %v108 = vld [vmem:[#allocation5 + $0x130] sm:$0xff]
    %v109 = vld [vmem:[#allocation5 + $0x138] sm:$0xff]
    %v110 = vld [vmem:[#allocation5 + $0x140] sm:$0xff]
    %v111 = vld [vmem:[#allocation5 + $0x148] sm:$0xff]
    %v112 = vld [vmem:[#allocation5 + $0x150] sm:$0xff]
    %v113 = vld [vmem:[#allocation5 + $0x158] sm:$0xff]
    %v114 = vld [vmem:[#allocation5 + $0x160] sm:$0xff]
    %v115 = vld [vmem:[#allocation5 + $0x168] sm:$0xff]
    %v116 = vld [vmem:[#allocation5 + $0x170] sm:$0xff]
    %v117 = vld [vmem:[#allocation5 + $0x178] sm:$0xff]
    %v118 = vld [vmem:[#allocation5 + $0x180] sm:$0xff]
    %v119 = vld [vmem:[#allocation5 + $0x188] sm:$0xff]
    %v120 = vld [vmem:[#allocation5 + $0x190] sm:$0xff]
    %v121 = vld [vmem:[#allocation5 + $0x198] sm:$0xff]
    %v122 = vld [vmem:[#allocation5 + $0x1a0] sm:$0xff]
    %v123 = vld [vmem:[#allocation5 + $0x1a8] sm:$0xff]
    %v124 = vld [vmem:[#allocation5 + $0x1b0] sm:$0xff]
    %v125 = vld [vmem:[#allocation5 + $0x1b8] sm:$0xff]
    %v126 = vld [vmem:[#allocation5 + $0x1c0] sm:$0xff]
    %v127 = vld [vmem:[#allocation5 + $0x1c8] sm:$0xff]
    %v128 = vld [vmem:[#allocation5 + $0x1d0] sm:$0xff]
    %v129 = vld [vmem:[#allocation5 + $0x1d8] sm:$0xff]
    %v130 = vld [vmem:[#allocation5 + $0x1e0] sm:$0xff]
    %v131 = vld [vmem:[#allocation5 + $0x1e8] sm:$0xff]
    %v132 = vld [vmem:[#allocation5 + $0x1f0] sm:$0xff]
    %v133 = vld [vmem:[#allocation5 + $0x1f8] sm:$0xff]
    %v134 = vld [vmem:[#allocation5 + $0x200] sm:$0xff]
    %v135 = vld [vmem:[#allocation5 + $0x208] sm:$0xff]
    %v136 = vld [vmem:[#allocation5 + $0x210] sm:$0xff]
    %v137 = vld [vmem:[#allocation5 + $0x218] sm:$0xff]
    %v138 = vld [vmem:[#allocation5 + $0x220] sm:$0xff]
    %v139 = vld [vmem:[#allocation5 + $0x228] sm:$0xff]
    %v140 = vld [vmem:[#allocation5 + $0x230] sm:$0xff]
    %v141 = vld [vmem:[#allocation5 + $0x238] sm:$0xff]
    %v142 = vld [vmem:[#allocation5 + $0x240] sm:$0xff]
    %v143 = vld [vmem:[#allocation5 + $0x248] sm:$0xff]
    %v144 = vld [vmem:[#allocation5 + $0x250] sm:$0xff]
    %v145 = vld [vmem:[#allocation5 + $0x258] sm:$0xff]
    %v146 = vld [vmem:[#allocation5 + $0x260] sm:$0xff]
    %v147 = vld [vmem:[#allocation5 + $0x268] sm:$0xff]
    %v148 = vld [vmem:[#allocation5 + $0x270] sm:$0xff]
    %v149 = vld [vmem:[#allocation5 + $0x278] sm:$0xff]
    %v150 = vld [vmem:[#allocation5 + $0x280] sm:$0xff]
    %v151 = vld [vmem:[#allocation5 + $0x288] sm:$0xff]
    %v152 = vld [vmem:[#allocation5 + $0x290] sm:$0xff]
    %v153 = vld [vmem:[#allocation5 + $0x298] sm:$0xff]
    %v154 = vld [vmem:[#allocation5 + $0x2a0] sm:$0xff]
    %v155 = vld [vmem:[#allocation5 + $0x2a8] sm:$0xff]
    %v156 = vld [vmem:[#allocation5 + $0x2b0] sm:$0xff]
    %v157 = vld [vmem:[#allocation5 + $0x2b8] sm:$0xff]
    %v158 = vld [vmem:[#allocation5 + $0x2c0] sm:$0xff]
    %v159 = vld [vmem:[#allocation5 + $0x2c8] sm:$0xff]
    %v160 = vld [vmem:[#allocation5 + $0x2d0] sm:$0xff]
    %v161 = vld [vmem:[#allocation5 + $0x2d8] sm:$0xff]
    %v162 = vld [vmem:[#allocation5 + $0x2e0] sm:$0xff]
    %v163 = vld [vmem:[#allocation5 + $0x2e8] sm:$0xff]
    %v164 = vld [vmem:[#allocation5 + $0x2f0] sm:$0xff]
    %v165 = vld [vmem:[#allocation5 + $0x2f8] sm:$0xff]
    %v166 = vld [vmem:[#allocation5 + $0x300] sm:$0xff]
    %v167 = vld [vmem:[#allocation5 + $0x308] sm:$0xff]
    %v168 = vld [vmem:[#allocation5 + $0x310] sm:$0xff]
    %v169 = vld [vmem:[#allocation5 + $0x318] sm:$0xff]
    %v170 = vld [vmem:[#allocation5 + $0x320] sm:$0xff]
    %v171 = vld [vmem:[#allocation5 + $0x328] sm:$0xff]
    %v172 = vld [vmem:[#allocation5 + $0x330] sm:$0xff]
    %v173 = vld [vmem:[#allocation5 + $0x338] sm:$0xff]
    %v174 = vld [vmem:[#allocation5 + $0x340] sm:$0xff]
    %v175 = vld [vmem:[#allocation5 + $0x348] sm:$0xff]
    %v176 = vld [vmem:[#allocation5 + $0x350] sm:$0xff]
    %v177 = vld [vmem:[#allocation5 + $0x358] sm:$0xff]
    %v178 = vld [vmem:[#allocation5 + $0x360] sm:$0xff]
    %v179 = vld [vmem:[#allocation5 + $0x368] sm:$0xff]
    %v180 = vld [vmem:[#allocation5 + $0x370] sm:$0xff]
    %v181 = vld [vmem:[#allocation5 + $0x378] sm:$0xff]
    %v182 = vld [vmem:[#allocation5 + $0x380] sm:$0xff]
    %v183 = vld [vmem:[#allocation5 + $0x388] sm:$0xff]
    %v184 = vld [vmem:[#allocation5 + $0x390] sm:$0xff]
    %v185 = vld [vmem:[#allocation5 + $0x398] sm:$0xff]
    %v186 = vld [vmem:[#allocation5 + $0x3a0] sm:$0xff]
    %v187 = vld [vmem:[#allocation5 + $0x3a8] sm:$0xff]
    %v188 = vld [vmem:[#allocation5 + $0x3b0] sm:$0xff]
    %v189 = vld [vmem:[#allocation5 + $0x3b8] sm:$0xff]
    %v190 = vld [vmem:[#allocation5 + $0x3c0] sm:$0xff]
    %v191 = vld [vmem:[#allocation5 + $0x3c8] sm:$0xff]
    %v192 = vld [vmem:[#allocation5 + $0x3d0] sm:$0xff]
    %v193 = vld [vmem:[#allocation5 + $0x3d8] sm:$0xff]
    %v194 = vld [vmem:[#allocation5 + $0x3e0] sm:$0xff]
    %v195 = vld [vmem:[#allocation5 + $0x3e8] sm:$0xff]
    %v196 = vld [vmem:[#allocation5 + $0x3f0] sm:$0xff]
    %v197 = vld [vmem:[#allocation5 + $0x3f8] sm:$0xff]
    %v198 = vld [vmem:[%s2] sm:$0x1]
    %v200 = vlaneseq
    %v201 = vshrl.u32 %v200, 7
    %v202 = vsub.s32 0, %v201
    %v203 = vrot.slane %v198, %v202
    %v213 = vcombine.low %v62, %v64
    %v214 = vcombine.high %v62, %v64
    %v215 = vcombine.low %v66, %v68
    %v216 = vcombine.high %v66, %v68
    %v218 = vunpack.c.l.s4 1983009808
    %v219 = vunpack.c.0.s8 %v218
    %v220 = vlaneseq
    %v221 = vshrl.u32 %v220, 7
    %v222 = vsub.s32 %v219, %v221
    %v223 = vrot.slane %v213, %v222
    %v225 = vunpack.c.l.s4 1983009808
    %v226 = vunpack.c.0.s8 %v225
    %v227 = vlaneseq
    %v228 = vshrl.u32 %v227, 7
    %v229 = vsub.s32 %v226, %v228
    %v230 = vrot.slane %v214, %v229
    %v232 = vunpack.c.l.s4 1983009808
    %v233 = vunpack.c.0.s8 %v232
    %v234 = vlaneseq
    %v235 = vshrl.u32 %v234, 7
    %v236 = vsub.s32 %v233, %v235
    %v237 = vrot.slane %v215, %v236
    %v239 = vunpack.c.l.s4 1983009808
    %v240 = vunpack.c.0.s8 %v239
    %v241 = vlaneseq
    %v242 = vshrl.u32 %v241, 7
    %v243 = vsub.s32 %v240, %v242
    %v244 = vrot.slane %v216, %v243
    %v245 = vcombine.low %v223, %v237
    %v246 = vcombine.high %v223, %v237
    %v247 = vcombine.low %v230, %v244
    %v248 = vcombine.high %v230, %v244
    %v249 = vcombine.low %v63, %v65
    %v250 = vcombine.high %v63, %v65
    %v251 = vcombine.low %v67, %v69
    %v252 = vcombine.high %v67, %v69
    %v254 = vunpack.c.l.s4 1983009808
    %v255 = vunpack.c.0.s8 %v254
    %v256 = vlaneseq
    %v257 = vshrl.u32 %v256, 7
    %v258 = vsub.s32 %v255, %v257
    %v259 = vrot.slane %v249, %v258
    %v261 = vunpack.c.l.s4 1983009808
    %v262 = vunpack.c.0.s8 %v261
    %v263 = vlaneseq
    %v264 = vshrl.u32 %v263, 7
    %v265 = vsub.s32 %v262, %v264
    %v266 = vrot.slane %v250, %v265
    %v268 = vunpack.c.l.s4 1983009808
    %v269 = vunpack.c.0.s8 %v268
    %v270 = vlaneseq
    %v271 = vshrl.u32 %v270, 7
    %v272 = vsub.s32 %v269, %v271
    %v273 = vrot.slane %v251, %v272
    %v275 = vunpack.c.l.s4 1983009808
    %v276 = vunpack.c.0.s8 %v275
    %v277 = vlaneseq
    %v278 = vshrl.u32 %v277, 7
    %v279 = vsub.s32 %v276, %v278
    %v280 = vrot.slane %v252, %v279
    %v281 = vcombine.low %v259, %v273
    %v282 = vcombine.high %v259, %v273
    %v283 = vcombine.low %v266, %v280
    %v284 = vcombine.high %v266, %v280
    %293 = vmatprep.subr.mxu0 0.0
    %294 = vmatpush1.msra.mxu0 %v85
    %295 = vmatprep.subr.mxu0 0.0
    %296 = vmatpush1.msra.mxu0 %v84
    %297 = vmatprep.subr.mxu0 0.0
    %298 = vmatpush1.msra.mxu0 %v83
    %299 = vmatprep.subr.mxu0 0.0
    %300 = vmatpush1.msra.mxu0 %v82
    %301 = vmatprep.subr.mxu0 0.0
    %302 = vmatpush1.msra.mxu0 %v81
    %303 = vmatprep.subr.mxu0 0.0
    %304 = vmatpush1.msra.mxu0 %v80
    %305 = vmatprep.subr.mxu0 0.0
    %306 = vmatpush1.msra.mxu0 %v79
    %307 = vmatprep.subr.mxu0 0.0
    %308 = vmatpush1.msra.mxu0 %v78
    %309 = vmatprep.subr.mxu0 0.0
    %310 = vmatpush1.msra.mxu0 %v77
    %311 = vmatprep.subr.mxu0 0.0
    %312 = vmatpush1.msra.mxu0 %v76
    %313 = vmatprep.subr.mxu0 0.0
    %314 = vmatpush1.msra.mxu0 %v75
    %315 = vmatprep.subr.mxu0 0.0
    %316 = vmatpush1.msra.mxu0 %v74
    %317 = vmatprep.subr.mxu0 0.0
    %318 = vmatpush1.msra.mxu0 %v73
    %319 = vmatprep.subr.mxu0 0.0
    %320 = vmatpush1.msra.mxu0 %v72
    %321 = vmatprep.subr.mxu0 0.0
    %322 = vmatpush1.msra.mxu0 %v71
    %323 = vmatprep.subr.mxu0 0.0
    %324 = vmatpush1.msra.mxu0 %v70
    %325 = vmatprep.subr.mxu0 0.0
    %326 = vmatpush2.msra.mxu0 %v101
    %327 = vmatprep.subr.mxu0 0.0
    %328 = vmatpush2.msra.mxu0 %v100
    %329 = vmatprep.subr.mxu0 0.0
    %330 = vmatpush2.msra.mxu0 %v99
    %331 = vmatprep.subr.mxu0 0.0
    %332 = vmatpush2.msra.mxu0 %v98
    %333 = vmatprep.subr.mxu0 0.0
    %334 = vmatpush2.msra.mxu0 %v97
    %335 = vmatprep.subr.mxu0 0.0
    %336 = vmatpush2.msra.mxu0 %v96
    %337 = vmatprep.subr.mxu0 0.0
    %338 = vmatpush2.msra.mxu0 %v95
    %339 = vmatprep.subr.mxu0 0.0
    %340 = vmatpush2.msra.mxu0 %v94
    %341 = vmatprep.subr.mxu0 0.0
    %342 = vmatpush2.msra.mxu0 %v93
    %343 = vmatprep.subr.mxu0 0.0
    %344 = vmatpush2.msra.mxu0 %v92
    %345 = vmatprep.subr.mxu0 0.0
    %346 = vmatpush2.msra.mxu0 %v91
    %347 = vmatprep.subr.mxu0 0.0
    %348 = vmatpush2.msra.mxu0 %v90
    %349 = vmatprep.subr.mxu0 0.0
    %350 = vmatpush2.msra.mxu0 %v89
    %351 = vmatprep.subr.mxu0 0.0
    %352 = vmatpush2.msra.mxu0 %v88
    %353 = vmatprep.subr.mxu0 0.0
    %354 = vmatpush2.msra.mxu0 %v87
    %355 = vmatprep.subr.mxu0 0.0
    %356 = vmatpush2.msra.mxu0 %v86
    %357 = vmatprep.mubr.f32.mxu0 %v246
    %358 = vmatmul.mubr.f32.gmra.mxu0 %v245
    %v359 = vpop.f32.mrf.mxu0
    %v360 = vadd.f32 %v203, %v359
    %v361 = vpop.f32.mrf.mxu0
    %362 = vdwg.mxu0
    %363 = vmatprep.subr.mxu0 0.0
    %364 = vmatpush1.msra.mxu0 %v117
    %365 = vmatprep.subr.mxu0 0.0
    %366 = vmatpush1.msra.mxu0 %v116
    %367 = vmatprep.subr.mxu0 0.0
    %368 = vmatpush1.msra.mxu0 %v115
    %369 = vmatprep.subr.mxu0 0.0
    %370 = vmatpush1.msra.mxu0 %v114
    %371 = vmatprep.subr.mxu0 0.0
    %372 = vmatpush1.msra.mxu0 %v113
    %373 = vmatprep.subr.mxu0 0.0
    %374 = vmatpush1.msra.mxu0 %v112
    %375 = vmatprep.subr.mxu0 0.0
    %376 = vmatpush1.msra.mxu0 %v111
    %377 = vmatprep.subr.mxu0 0.0
    %378 = vmatpush1.msra.mxu0 %v110
    %379 = vmatprep.subr.mxu0 0.0
    %380 = vmatpush1.msra.mxu0 %v109
    %381 = vmatprep.subr.mxu0 0.0
    %382 = vmatpush1.msra.mxu0 %v108
    %383 = vmatprep.subr.mxu0 0.0
    %384 = vmatpush1.msra.mxu0 %v107
    %385 = vmatprep.subr.mxu0 0.0
    %386 = vmatpush1.msra.mxu0 %v106
    %387 = vmatprep.subr.mxu0 0.0
    %388 = vmatpush1.msra.mxu0 %v105
    %389 = vmatprep.subr.mxu0 0.0
    %390 = vmatpush1.msra.mxu0 %v104
    %391 = vmatprep.subr.mxu0 0.0
    %392 = vmatpush1.msra.mxu0 %v103
    %393 = vmatprep.subr.mxu0 0.0
    %394 = vmatpush1.msra.mxu0 %v102
    %395 = vmatprep.subr.mxu0 0.0
    %396 = vmatpush2.msra.mxu0 %v133
    %397 = vmatprep.subr.mxu0 0.0
    %398 = vmatpush2.msra.mxu0 %v132
    %399 = vmatprep.subr.mxu0 0.0
    %400 = vmatpush2.msra.mxu0 %v131
    %401 = vmatprep.subr.mxu0 0.0
    %402 = vmatpush2.msra.mxu0 %v130
    %403 = vmatprep.subr.mxu0 0.0
    %404 = vmatpush2.msra.mxu0 %v129
    %405 = vmatprep.subr.mxu0 0.0
    %406 = vmatpush2.msra.mxu0 %v128
    %407 = vmatprep.subr.mxu0 0.0
    %408 = vmatpush2.msra.mxu0 %v127
    %409 = vmatprep.subr.mxu0 0.0
    %410 = vmatpush2.msra.mxu0 %v126
    %411 = vmatprep.subr.mxu0 0.0
    %412 = vmatpush2.msra.mxu0 %v125
    %413 = vmatprep.subr.mxu0 0.0
    %414 = vmatpush2.msra.mxu0 %v124
    %415 = vmatprep.subr.mxu0 0.0
    %416 = vmatpush2.msra.mxu0 %v123
    %417 = vmatprep.subr.mxu0 0.0
    %418 = vmatpush2.msra.mxu0 %v122
    %419 = vmatprep.subr.mxu0 0.0
    %420 = vmatpush2.msra.mxu0 %v121
    %421 = vmatprep.subr.mxu0 0.0
    %422 = vmatpush2.msra.mxu0 %v120
    %423 = vmatprep.subr.mxu0 0.0
    %424 = vmatpush2.msra.mxu0 %v119
    %425 = vmatprep.subr.mxu0 0.0
    %426 = vmatpush2.msra.mxu0 %v118
    %427 = vmatprep.mubr.f32.mxu0 %v248
    %428 = vmatmul.mubr.f32.gmra.mxu0 %v247
    %v429 = vpop.f32.mrf.mxu0
    %v430 = vadd.f32 %v360, %v429
    %v431 = vpop.f32.mrf.mxu0
    %432 = vdwg.mxu0
    %433 = vmatprep.subr.mxu0 0.0
    %434 = vmatpush1.msra.mxu0 %v149
    %435 = vmatprep.subr.mxu0 0.0
    %436 = vmatpush1.msra.mxu0 %v148
    %437 = vmatprep.subr.mxu0 0.0
    %438 = vmatpush1.msra.mxu0 %v147
    %439 = vmatprep.subr.mxu0 0.0
    %440 = vmatpush1.msra.mxu0 %v146
    %441 = vmatprep.subr.mxu0 0.0
    %442 = vmatpush1.msra.mxu0 %v145
    %443 = vmatprep.subr.mxu0 0.0
    %444 = vmatpush1.msra.mxu0 %v144
    %445 = vmatprep.subr.mxu0 0.0
    %446 = vmatpush1.msra.mxu0 %v143
    %447 = vmatprep.subr.mxu0 0.0
    %448 = vmatpush1.msra.mxu0 %v142
    %449 = vmatprep.subr.mxu0 0.0
    %450 = vmatpush1.msra.mxu0 %v141
    %451 = vmatprep.subr.mxu0 0.0
    %452 = vmatpush1.msra.mxu0 %v140
    %453 = vmatprep.subr.mxu0 0.0
    %454 = vmatpush1.msra.mxu0 %v139
    %455 = vmatprep.subr.mxu0 0.0
    %456 = vmatpush1.msra.mxu0 %v138
    %457 = vmatprep.subr.mxu0 0.0
    %458 = vmatpush1.msra.mxu0 %v137
    %459 = vmatprep.subr.mxu0 0.0
    %460 = vmatpush1.msra.mxu0 %v136
    %461 = vmatprep.subr.mxu0 0.0
    %462 = vmatpush1.msra.mxu0 %v135
    %463 = vmatprep.subr.mxu0 0.0
    %464 = vmatpush1.msra.mxu0 %v134
    %465 = vmatprep.subr.mxu0 0.0
    %466 = vmatpush2.msra.mxu0 %v165
    %467 = vmatprep.subr.mxu0 0.0
    %468 = vmatpush2.msra.mxu0 %v164
    %469 = vmatprep.subr.mxu0 0.0
    %470 = vmatpush2.msra.mxu0 %v163
    %471 = vmatprep.subr.mxu0 0.0
    %472 = vmatpush2.msra.mxu0 %v162
    %473 = vmatprep.subr.mxu0 0.0
    %474 = vmatpush2.msra.mxu0 %v161
    %475 = vmatprep.subr.mxu0 0.0
    %476 = vmatpush2.msra.mxu0 %v160
    %477 = vmatprep.subr.mxu0 0.0
    %478 = vmatpush2.msra.mxu0 %v159
    %479 = vmatprep.subr.mxu0 0.0
    %480 = vmatpush2.msra.mxu0 %v158
    %481 = vmatprep.subr.mxu0 0.0
    %482 = vmatpush2.msra.mxu0 %v157
    %483 = vmatprep.subr.mxu0 0.0
    %484 = vmatpush2.msra.mxu0 %v156
    %485 = vmatprep.subr.mxu0 0.0
    %486 = vmatpush2.msra.mxu0 %v155
    %487 = vmatprep.subr.mxu0 0.0
    %488 = vmatpush2.msra.mxu0 %v154
    %489 = vmatprep.subr.mxu0 0.0
    %490 = vmatpush2.msra.mxu0 %v153
    %491 = vmatprep.subr.mxu0 0.0
    %492 = vmatpush2.msra.mxu0 %v152
    %493 = vmatprep.subr.mxu0 0.0
    %494 = vmatpush2.msra.mxu0 %v151
    %495 = vmatprep.subr.mxu0 0.0
    %496 = vmatpush2.msra.mxu0 %v150
    %497 = vmatprep.mubr.f32.mxu0 %v282
    %498 = vmatmul.mubr.f32.gmra.mxu0 %v281
    %v499 = vpop.f32.mrf.mxu0
    %v500 = vadd.f32 %v430, %v499
    %v501 = vpop.f32.mrf.mxu0
    %502 = vdwg.mxu0
    %503 = vmatprep.subr.mxu0 0.0
    %504 = vmatpush1.msra.mxu0 %v181
    %505 = vmatprep.subr.mxu0 0.0
    %506 = vmatpush1.msra.mxu0 %v180
    %507 = vmatprep.subr.mxu0 0.0
    %508 = vmatpush1.msra.mxu0 %v179
    %509 = vmatprep.subr.mxu0 0.0
    %510 = vmatpush1.msra.mxu0 %v178
    %511 = vmatprep.subr.mxu0 0.0
    %512 = vmatpush1.msra.mxu0 %v177
    %513 = vmatprep.subr.mxu0 0.0
    %514 = vmatpush1.msra.mxu0 %v176
    %515 = vmatprep.subr.mxu0 0.0
    %516 = vmatpush1.msra.mxu0 %v175
    %517 = vmatprep.subr.mxu0 0.0
    %518 = vmatpush1.msra.mxu0 %v174
    %519 = vmatprep.subr.mxu0 0.0
    %520 = vmatpush1.msra.mxu0 %v173
    %521 = vmatprep.subr.mxu0 0.0
    %522 = vmatpush1.msra.mxu0 %v172
    %523 = vmatprep.subr.mxu0 0.0
    %524 = vmatpush1.msra.mxu0 %v171
    %525 = vmatprep.subr.mxu0 0.0
    %526 = vmatpush1.msra.mxu0 %v170
    %527 = vmatprep.subr.mxu0 0.0
    %528 = vmatpush1.msra.mxu0 %v169
    %529 = vmatprep.subr.mxu0 0.0
    %530 = vmatpush1.msra.mxu0 %v168
    %531 = vmatprep.subr.mxu0 0.0
    %532 = vmatpush1.msra.mxu0 %v167
    %533 = vmatprep.subr.mxu0 0.0
    %534 = vmatpush1.msra.mxu0 %v166
    %535 = vmatprep.subr.mxu0 0.0
    %536 = vmatpush2.msra.mxu0 %v197
    %537 = vmatprep.subr.mxu0 0.0
    %538 = vmatpush2.msra.mxu0 %v196
    %539 = vmatprep.subr.mxu0 0.0
    %540 = vmatpush2.msra.mxu0 %v195
    %541 = vmatprep.subr.mxu0 0.0
    %542 = vmatpush2.msra.mxu0 %v194
    %543 = vmatprep.subr.mxu0 0.0
    %544 = vmatpush2.msra.mxu0 %v193
    %545 = vmatprep.subr.mxu0 0.0
    %546 = vmatpush2.msra.mxu0 %v192
    %547 = vmatprep.subr.mxu0 0.0
    %548 = vmatpush2.msra.mxu0 %v191
    %549 = vmatprep.subr.mxu0 0.0
    %550 = vmatpush2.msra.mxu0 %v190
    %551 = vmatprep.subr.mxu0 0.0
    %552 = vmatpush2.msra.mxu0 %v189
    %553 = vmatprep.subr.mxu0 0.0
    %554 = vmatpush2.msra.mxu0 %v188
    %555 = vmatprep.subr.mxu0 0.0
    %556 = vmatpush2.msra.mxu0 %v187
    %557 = vmatprep.subr.mxu0 0.0
    %558 = vmatpush2.msra.mxu0 %v186
    %559 = vmatprep.subr.mxu0 0.0
    %560 = vmatpush2.msra.mxu0 %v185
    %561 = vmatprep.subr.mxu0 0.0
    %562 = vmatpush2.msra.mxu0 %v184
    %563 = vmatprep.subr.mxu0 0.0
    %564 = vmatpush2.msra.mxu0 %v183
    %565 = vmatprep.subr.mxu0 0.0
    %566 = vmatpush2.msra.mxu0 %v182
    %567 = vmatprep.mubr.f32.mxu0 %v284
    %568 = vmatmul.mubr.f32.gmra.mxu0 %v283
    %v569 = vpop.f32.mrf.mxu0
    %v570 = vadd.f32 %v500, %v569
    %v571 = vpop.f32.mrf.mxu0
    %572 = vdwg.mxu0
    %v573 = vmul.f32 %v570, 0.5
    %v574 = vmul.f32 %v570, 0.70710677
    %v575 = verf.f32.pop %v574
    %v576 = vadd.f32 %v575, 1.0
    %v577 = vmul.f32 %v573, %v576
    %v578 = vld [vmem:[#allocation7] sm:$0xff]
    %v579 = vld [vmem:[#allocation7 + $0x8] sm:$0xff]
    %v580 = vld [vmem:[#allocation7 + $0x10] sm:$0xff]
    %v581 = vld [vmem:[#allocation7 + $0x18] sm:$0xff]
    %v582 = vld [vmem:[#allocation7 + $0x20] sm:$0xff]
    %v583 = vld [vmem:[#allocation7 + $0x28] sm:$0xff]
    %v584 = vld [vmem:[#allocation7 + $0x30] sm:$0xff]
    %v585 = vld [vmem:[#allocation7 + $0x38] sm:$0xff]
    %v586 = vld [vmem:[#allocation7 + $0x40] sm:$0xff]
    %v587 = vld [vmem:[#allocation7 + $0x48] sm:$0xff]
    %v588 = vld [vmem:[#allocation7 + $0x50] sm:$0xff]
    %v589 = vld [vmem:[#allocation7 + $0x58] sm:$0xff]
    %v590 = vld [vmem:[#allocation7 + $0x60] sm:$0xff]
    %v591 = vld [vmem:[#allocation7 + $0x68] sm:$0xff]
    %v592 = vld [vmem:[#allocation7 + $0x70] sm:$0xff]
    %v593 = vld [vmem:[#allocation7 + $0x78] sm:$0xff]
    %v594 = vld [vmem:[%s4] sm:$0x1]
    %v596 = vlaneseq
    %v597 = vshrl.u32 %v596, 7
    %v598 = vsub.s32 0, %v597
    %v599 = vrot.slane %v594, %v598
    %601 = vmatprep.subr.mxu0 0.0
    %602 = vmatpush1.msra.mxu0 %v593
    %603 = vmatprep.subr.mxu0 0.0
    %604 = vmatpush1.msra.mxu0 %v592
    %605 = vmatprep.subr.mxu0 0.0
    %606 = vmatpush1.msra.mxu0 %v591
    %607 = vmatprep.subr.mxu0 0.0
    %608 = vmatpush1.msra.mxu0 %v590
    %609 = vmatprep.subr.mxu0 0.0
    %610 = vmatpush1.msra.mxu0 %v589
    %611 = vmatprep.subr.mxu0 0.0
    %612 = vmatpush1.msra.mxu0 %v588
    %613 = vmatprep.subr.mxu0 0.0
    %614 = vmatpush1.msra.mxu0 %v587
    %615 = vmatprep.subr.mxu0 0.0
    %616 = vmatpush1.msra.mxu0 %v586
    %617 = vmatprep.subr.mxu0 0.0
    %618 = vmatpush1.msra.mxu0 %v585
    %619 = vmatprep.subr.mxu0 0.0
    %620 = vmatpush1.msra.mxu0 %v584
    %621 = vmatprep.subr.mxu0 0.0
    %622 = vmatpush1.msra.mxu0 %v583
    %623 = vmatprep.subr.mxu0 0.0
    %624 = vmatpush1.msra.mxu0 %v582
    %625 = vmatprep.subr.mxu0 0.0
    %626 = vmatpush1.msra.mxu0 %v581
    %627 = vmatprep.subr.mxu0 0.0
    %628 = vmatpush1.msra.mxu0 %v580
    %629 = vmatprep.subr.mxu0 0.0
    %630 = vmatpush1.msra.mxu0 %v579
    %631 = vmatprep.subr.mxu0 0.0
    %632 = vmatpush1.msra.mxu0 %v578
    %633 = vmatprep.subr.mxu0 0.0
    %634 = vmatpush2.msra.mxu0 0.0
    %635 = vmatprep.subr.mxu0 0.0
    %636 = vmatpush2.msra.mxu0 0.0
    %637 = vmatprep.subr.mxu0 0.0
    %638 = vmatpush2.msra.mxu0 0.0
    %639 = vmatprep.subr.mxu0 0.0
    %640 = vmatpush2.msra.mxu0 0.0
    %641 = vmatprep.subr.mxu0 0.0
    %642 = vmatpush2.msra.mxu0 0.0
    %643 = vmatprep.subr.mxu0 0.0
    %644 = vmatpush2.msra.mxu0 0.0
    %645 = vmatprep.subr.mxu0 0.0
    %646 = vmatpush2.msra.mxu0 0.0
    %647 = vmatprep.subr.mxu0 0.0
    %648 = vmatpush2.msra.mxu0 0.0
    %649 = vmatprep.subr.mxu0 0.0
    %650 = vmatpush2.msra.mxu0 0.0
    %651 = vmatprep.subr.mxu0 0.0
    %652 = vmatpush2.msra.mxu0 0.0
    %653 = vmatprep.subr.mxu0 0.0
    %654 = vmatpush2.msra.mxu0 0.0
    %655 = vmatprep.subr.mxu0 0.0
    %656 = vmatpush2.msra.mxu0 0.0
    %657 = vmatprep.subr.mxu0 0.0
    %658 = vmatpush2.msra.mxu0 0.0
    %659 = vmatprep.subr.mxu0 0.0
    %660 = vmatpush2.msra.mxu0 0.0
    %661 = vmatprep.subr.mxu0 0.0
    %662 = vmatpush2.msra.mxu0 0.0
    %663 = vmatprep.subr.mxu0 0.0
    %664 = vmatpush2.msra.mxu0 0.0
    %665 = vmatprep.mubr.f32.mxu0 0.0
    %666 = vmatmul.mubr.f32.gmra.mxu0 %v577
    %v667 = vpop.f32.mrf.mxu0
    %v668 = vadd.f32 %v599, %v667
    %v669 = vpop.f32.mrf.mxu0
    %670 = vdwg.mxu0
    %671 = vst [vmem:[#allocation8] sm:$0xff] %v668
    // Predicated region
    $region34: #{tpu_custom_call.1} parent=1 // pred_check
      _
    $region35: #{tpu_custom_call.1} parent=1 // pred_check_branch
      %673 = sbr.rel (0) target = $region37
    $region36: #{tpu_custom_call.1} parent=1 // pred_region
      %s675 = ssub.s32 128, 32
      %676 = vsyncadd [#allocation4], %s675
      %s677 = sshll.u32 [#allocation8], 4
      %s678 = int_to_ptr.vmem [resolvable:$true] %s677
      %683 = dma.vmem_to_hbm [thread:$0]  %s678, 32, %s5, [#allocation4], 32, 32, 2
    $region37: #{tpu_custom_call.1} parent=1 // pred_fallthru
      _
    // Predicated region
    $region38: #{tpu_custom_call.1} parent=1 // pred_check
      _
    $region39: #{tpu_custom_call.1} parent=1 // pred_check_branch
      %685 = sbr.rel (0) target = $region41
    $region40: #{tpu_custom_call.1} parent=1 // pred_region
      %686 = dma.done [#allocation4], 128
    $region41: #{tpu_custom_call.1} parent=1 // pred_fallthru
      _
    %687 = vsyncpa [#allocation3], 1
    %688 = vsyncpa [#allocation6], 1
    %689 = vsyncpa [#allocation4], 1

</llo_original>
